<compile_context>
chip_gen: v7x
topology: tpu7x:2x2x1
jax: 0.10.0
libtpu: 0.0.40
codegen_flags: <defaults>
</compile_context>

<pallas_src>
import jax
import jax.numpy as jnp
from jax import lax
from jax.experimental import pallas as pl
from jax.experimental.pallas import tpu as pltpu

IN_DIM = 1568   # fixed by the module (ndim=0)
OUT_DIM = 256


def _round_up(n, m):
    return ((n + m - 1) // m) * m


def _linear_kernel(x_ref, w_ref, b_ref, o_ref):
    # x_ref: (TM, K) bf16, w_ref: (N, K) bf16 (native nn.Linear layout),
    # b_ref: (1, N) f32, o_ref: (TM, N) f32.
    # Contract K of x against K of W -> (TM, N), accumulate in f32 on the MXU.
    acc = lax.dot_general(
        x_ref[...], w_ref[...],
        dimension_numbers=(((1,), (1,)), ((), ())),
        preferred_element_type=jnp.float32)
    o_ref[...] = (acc + b_ref[...]).astype(o_ref.dtype)


def panels_to_embeddings_forward(x, weight, bias, *, tm=256,
                                 compute_dtype=jnp.bfloat16):
    """x: any shape reshapable to (-1, 1568).
       weight: (256, 1568)  (native PyTorch nn.Linear layout), bias: (256,)."""
    x2d = x.reshape(-1, IN_DIM)                 # glue: the .view(-1, in_dim)
    M = x2d.shape[0]

    # Tile size along M: cap at 256, keep it sublane-aligned (multiple of 8).
    tm = min(tm, _round_up(M, 8))
    grid_m = pl.cdiv(M, tm)

    # Cast operands to the MXU-native dtype at the boundary; keep bias f32.
    x_c = x2d.astype(compute_dtype)
    w_c = weight.astype(compute_dtype)          # native (256, 1568), no .T
    b2d = bias.reshape(1, OUT_DIM).astype(jnp.float32)

    itemsize = jnp.dtype(compute_dtype).itemsize
    cost = pl.CostEstimate(
        flops=2 * M * IN_DIM * OUT_DIM,
        transcendentals=0,
        bytes_accessed=(M * IN_DIM * itemsize          # x
                        + OUT_DIM * IN_DIM * itemsize  # W
                        + OUT_DIM * 4                  # bias
                        + M * OUT_DIM * 4))            # output

    out = pl.pallas_call(
        _linear_kernel,
        out_shape=jax.ShapeDtypeStruct((M, OUT_DIM), jnp.float32),
        grid_spec=pltpu.PrefetchScalarGridSpec(
            num_scalar_prefetch=0,
            grid=(grid_m,),
            in_specs=[
                # x tile marches along M.
                pl.BlockSpec((tm, IN_DIM), lambda i: (i, 0)),
                # Weight / bias: constant index_map -> DMA'd once, resident.
                pl.BlockSpec((OUT_DIM, IN_DIM), lambda i: (0, 0)),
                pl.BlockSpec((1, OUT_DIM), lambda i: (0, 0)),
            ],
            out_specs=pl.BlockSpec((tm, OUT_DIM), lambda i: (i, 0)),
        ),
        compiler_params=pltpu.CompilerParams(
            dimension_semantics=("parallel",)),   # v7x: shard tiles over 2 TCs
        cost_estimate=cost,
    )(x_c, w_c, b2d)
    return out


if __name__ == "__main__":
    key = jax.random.PRNGKey(0)
    kx, kw, kb = jax.random.split(key, 3)

    # Deterministic parameter init (nn.Linear(1568, 256) shapes).
    bound = 1.0 / jnp.sqrt(IN_DIM)
    weight = jax.random.uniform(kw, (OUT_DIM, IN_DIM), jnp.float32,
                                minval=-bound, maxval=bound)
    bias = jax.random.uniform(kb, (OUT_DIM,), jnp.float32,
                              minval=-bound, maxval=bound)

    # Small input consistent with the forward: 2 "panel groups" of 8 panels,
    # each panel feature = 1568  ->  flattens to (16, 1568).
    x = jax.random.normal(kx, (2, 8, IN_DIM), jnp.float32)

    y = panels_to_embeddings_forward(x, weight, bias)
    y = jax.block_until_ready(y)
    assert y.shape == (16, OUT_DIM)

    # Reference matching the kernel math (bf16 operands, f32 accumulate).
    xb = x.reshape(-1, IN_DIM).astype(jnp.bfloat16).astype(jnp.float32)
    wb = weight.astype(jnp.bfloat16).astype(jnp.float32)
    ref_bf16 = xb @ wb.T + bias
    assert jnp.allclose(y, ref_bf16, atol=1e-2, rtol=1e-2)

    # Loose check against the exact f32 PyTorch semantics.
    ref_f32 = x.reshape(-1, IN_DIM) @ weight.T + bias
    assert jnp.allclose(y, ref_f32, atol=5e-2, rtol=5e-2)

    print("KERNEL_OK")
</pallas_src>

<mosaic_0001>
module attributes {stable_mosaic.version = 11 : i64} {
  func.func @_linear_kernel(%arg0: i32, %arg1: memref<16x1568xbf16, #tpu.memory_space<vmem>>, %arg2: memref<256x1568xbf16, #tpu.memory_space<vmem>>, %arg3: memref<1x256xf32, #tpu.memory_space<vmem>>, %arg4: memref<16x256xf32, #tpu.memory_space<vmem>>) attributes {dimension_semantics = [#tpu.dimension_semantics<parallel>], iteration_bounds = array<i64: 1>, scalar_prefetch = 0 : i64, scratch_operands = 0 : i64, tpu.core_type = #tpu.core_type<tc>, window_params = [{transform_indices = @transform_0, window_bounds = array<i64: 16, 1568>}, {pipeline_mode = #tpu.pipeline_mode<synchronous>, transform_indices = @transform_1, window_bounds = array<i64: 256, 1568>}, {pipeline_mode = #tpu.pipeline_mode<synchronous>, transform_indices = @transform_2, window_bounds = array<i64: 1, 256>}, {transform_indices = @transform_3, window_bounds = array<i64: 16, 256>}]} {
    %c0 = arith.constant 0 : index
    %c0_0 = arith.constant 0 : index
    %0 = vector.load %arg1[%c0, %c0_0] : memref<16x1568xbf16, #tpu.memory_space<vmem>>, vector<16x1568xbf16>
    %c0_1 = arith.constant 0 : index
    %c0_2 = arith.constant 0 : index
    %1 = vector.load %arg2[%c0_1, %c0_2] : memref<256x1568xbf16, #tpu.memory_space<vmem>>, vector<256x1568xbf16>
    %cst = arith.constant dense<0.000000e+00> : vector<16x256xf32>
    %2 = tpu.matmul %0, %1, %cst {dimension_numbers = #tpu.dot_dimension_numbers<[1], [1], [0], [0], [0, 0, 1, 0], [], []>} : vector<16x1568xbf16>, vector<256x1568xbf16>, vector<16x256xf32> -> vector<16x256xf32>
    %c0_3 = arith.constant 0 : index
    %c0_4 = arith.constant 0 : index
    %3 = vector.load %arg3[%c0_3, %c0_4] : memref<1x256xf32, #tpu.memory_space<vmem>>, vector<1x256xf32>
    %4 = vector.broadcast %3 : vector<1x256xf32> to vector<16x256xf32>
    %5 = arith.addf %2, %4 : vector<16x256xf32>
    %c0_5 = arith.constant 0 : index
    %c0_6 = arith.constant 0 : index
    %6 = vector.load %arg4[%c0_5, %c0_6] : memref<16x256xf32, #tpu.memory_space<vmem>>, vector<16x256xf32>
    tpu.vector_store %arg4[%c0_5, %c0_6], %5 {strides = array<i32>} : memref<16x256xf32, #tpu.memory_space<vmem>>, vector<16x256xf32>,
    return
  }
  func.func @transform_0(%arg0: i32) -> (i32, i32) {
    %c0_i32 = arith.constant 0 : i32
    %c0_i32_0 = arith.constant 0 : i32
    return %arg0, %c0_i32 : i32, i32
  }
  func.func @transform_1(%arg0: i32) -> (i32, i32) {
    %c0_i32 = arith.constant 0 : i32
    %c0_i32_0 = arith.constant 0 : i32
    %c0_i32_1 = arith.constant 0 : i32
    return %c0_i32, %c0_i32_0 : i32, i32
  }
  func.func @transform_2(%arg0: i32) -> (i32, i32) {
    %c0_i32 = arith.constant 0 : i32
    %c0_i32_0 = arith.constant 0 : i32
    %c0_i32_1 = arith.constant 0 : i32
    return %c0_i32, %c0_i32_0 : i32, i32
  }
  func.func @transform_3(%arg0: i32) -> (i32, i32) {
    %c0_i32 = arith.constant 0 : i32
    %c0_i32_0 = arith.constant 0 : i32
    return %arg0, %c0_i32 : i32, i32
  }
}

</mosaic_0001>

<llo_original>
// kernel: tpu_custom_call.1
$region0: #{tpu_custom_call.1}
  #allocation0 [shape = 'u32[]', space=smem, size = 0x4, offset = 0x4, fixed_abs, tag = 'smem constant byte address 0x4 - core index']
  #allocation1 [shape = 'u32[144,128]{1,0:T(1,128)}', space=vmem, size = 0x12000, scoped, tag = 'internal scratch']
  %s0 = inlined_call_operand.vmem [shape: bf16[16,1568], index: 0, kind: input, shape index: {}]
  %s1 = inlined_call_operand.vmem [shape: bf16[256,1568], index: 1, kind: input, shape index: {}]
  %s2 = inlined_call_operand.vmem [shape: f32[1,256], index: 2, kind: input, shape index: {}]
  %s3 = inlined_call_operand.hbm [shape: f32[16,256], index: 3, kind: output, shape index: {}]
  %s4 = sld [smem:[#allocation0]]
  $region22: #{tpu_custom_call.1} parent=0
    _
  %s6 = ssub.s32 1, %s4
  %s7 = scalar_select 0, %s6, %s4
  $region1: #{tpu_custom_call.1} parent=0
    #allocation2 [shape = 'u8[16384]{0}', space=vmem, size = 0x4000, scoped, tag = 'output window, operand 0, single buffered']
    #allocation3 [shape = 's32[1]{0}', space=sflag, size = 0x4, scoped, tag = 'scoped memory for tpu_custom_call.1']
    %8 = vsyncpa [#allocation3], 0
    // Predicated region
    $region2: #{tpu_custom_call.1} parent=1 // pred_check
      _
    $region3: #{tpu_custom_call.1} parent=1 // pred_check_branch
      %10 = sbr.rel (0) target = $region5
    $region4: #{tpu_custom_call.1} parent=1 // pred_region
      _
    $region5: #{tpu_custom_call.1} parent=1 // pred_fallthru
      _
    // Predicated region
    $region6: #{tpu_custom_call.1} parent=1 // pred_check
      _
    $region7: #{tpu_custom_call.1} parent=1 // pred_check_branch
      %12 = sbr.rel (0) target = $region9
    $region8: #{tpu_custom_call.1} parent=1 // pred_region
      _
    $region9: #{tpu_custom_call.1} parent=1 // pred_fallthru
      _
    // Predicated region
    $region10: #{tpu_custom_call.1} parent=1 // pred_check
      _
    $region11: #{tpu_custom_call.1} parent=1 // pred_check_branch
      %14 = sbr.rel (0) target = $region13
    $region12: #{tpu_custom_call.1} parent=1 // pred_region
      _
    $region13: #{tpu_custom_call.1} parent=1 // pred_fallthru
      _
    %v16 = vld [vmem:[%s0] sm:$0xff]
    %v17 = vld [vmem:[%s0 + $0x8] sm:$0xff]
    %v18 = vld [vmem:[%s0 + $0x10] sm:$0xff]
    %v19 = vld [vmem:[%s0 + $0x18] sm:$0xff]
    %v20 = vld [vmem:[%s0 + $0x20] sm:$0xff]
    %v21 = vld [vmem:[%s0 + $0x28] sm:$0xff]
    %v22 = vld [vmem:[%s0 + $0x30] sm:$0xf]
    %v23 = vld [vmem:[%s0 + $0x34] sm:$0xff]
    %v24 = vld [vmem:[%s0 + $0x3c] sm:$0xff]
    %v25 = vld [vmem:[%s0 + $0x44] sm:$0xff]
    %v26 = vld [vmem:[%s0 + $0x4c] sm:$0xff]
    %v27 = vld [vmem:[%s0 + $0x54] sm:$0xff]
    %v28 = vld [vmem:[%s0 + $0x5c] sm:$0xff]
    %v29 = vld [vmem:[%s0 + $0x64] sm:$0xf]
    %v30 = vld [vmem:[%s1] sm:$0xff]
    %v31 = vld [vmem:[%s1 + $0x8] sm:$0xff]
    %v32 = vld [vmem:[%s1 + $0x10] sm:$0xff]
    %v33 = vld [vmem:[%s1 + $0x18] sm:$0xff]
    %v34 = vld [vmem:[%s1 + $0x20] sm:$0xff]
    %v35 = vld [vmem:[%s1 + $0x28] sm:$0xff]
    %v36 = vld [vmem:[%s1 + $0x30] sm:$0xf]
    %v37 = vld [vmem:[%s1 + $0x34] sm:$0xff]
    %v38 = vld [vmem:[%s1 + $0x3c] sm:$0xff]
    %v39 = vld [vmem:[%s1 + $0x44] sm:$0xff]
    %v40 = vld [vmem:[%s1 + $0x4c] sm:$0xff]
    %v41 = vld [vmem:[%s1 + $0x54] sm:$0xff]
    %v42 = vld [vmem:[%s1 + $0x5c] sm:$0xff]
    %v43 = vld [vmem:[%s1 + $0x64] sm:$0xf]
    %v44 = vld [vmem:[%s1 + $0x68] sm:$0xff]
    %v45 = vld [vmem:[%s1 + $0x70] sm:$0xff]
    %v46 = vld [vmem:[%s1 + $0x78] sm:$0xff]
    %v47 = vld [vmem:[%s1 + $0x80] sm:$0xff]
    %v48 = vld [vmem:[%s1 + $0x88] sm:$0xff]
    %v49 = vld [vmem:[%s1 + $0x90] sm:$0xff]
    %v50 = vld [vmem:[%s1 + $0x98] sm:$0xf]
    %v51 = vld [vmem:[%s1 + $0x9c] sm:$0xff]
    %v52 = vld [vmem:[%s1 + $0xa4] sm:$0xff]
    %v53 = vld [vmem:[%s1 + $0xac] sm:$0xff]
    %v54 = vld [vmem:[%s1 + $0xb4] sm:$0xff]
    %v55 = vld [vmem:[%s1 + $0xbc] sm:$0xff]
    %v56 = vld [vmem:[%s1 + $0xc4] sm:$0xff]
    %v57 = vld [vmem:[%s1 + $0xcc] sm:$0xf]
    %v58 = vld [vmem:[%s1 + $0xd0] sm:$0xff]
    %v59 = vld [vmem:[%s1 + $0xd8] sm:$0xff]
    %v60 = vld [vmem:[%s1 + $0xe0] sm:$0xff]
    %v61 = vld [vmem:[%s1 + $0xe8] sm:$0xff]
    %v62 = vld [vmem:[%s1 + $0xf0] sm:$0xff]
    %v63 = vld [vmem:[%s1 + $0xf8] sm:$0xff]
    %v64 = vld [vmem:[%s1 + $0x100] sm:$0xf]
    %v65 = vld [vmem:[%s1 + $0x104] sm:$0xff]
    %v66 = vld [vmem:[%s1 + $0x10c] sm:$0xff]
    %v67 = vld [vmem:[%s1 + $0x114] sm:$0xff]
    %v68 = vld [vmem:[%s1 + $0x11c] sm:$0xff]
    %v69 = vld [vmem:[%s1 + $0x124] sm:$0xff]
    %v70 = vld [vmem:[%s1 + $0x12c] sm:$0xff]
    %v71 = vld [vmem:[%s1 + $0x134] sm:$0xf]
    %v72 = vld [vmem:[%s1 + $0x138] sm:$0xff]
    %v73 = vld [vmem:[%s1 + $0x140] sm:$0xff]
    %v74 = vld [vmem:[%s1 + $0x148] sm:$0xff]
    %v75 = vld [vmem:[%s1 + $0x150] sm:$0xff]
    %v76 = vld [vmem:[%s1 + $0x158] sm:$0xff]
    %v77 = vld [vmem:[%s1 + $0x160] sm:$0xff]
    %v78 = vld [vmem:[%s1 + $0x168] sm:$0xf]
    %v79 = vld [vmem:[%s1 + $0x16c] sm:$0xff]
    %v80 = vld [vmem:[%s1 + $0x174] sm:$0xff]
    %v81 = vld [vmem:[%s1 + $0x17c] sm:$0xff]
    %v82 = vld [vmem:[%s1 + $0x184] sm:$0xff]
    %v83 = vld [vmem:[%s1 + $0x18c] sm:$0xff]
    %v84 = vld [vmem:[%s1 + $0x194] sm:$0xff]
    %v85 = vld [vmem:[%s1 + $0x19c] sm:$0xf]
    %v86 = vld [vmem:[%s1 + $0x1a0] sm:$0xff]
    %v87 = vld [vmem:[%s1 + $0x1a8] sm:$0xff]
    %v88 = vld [vmem:[%s1 + $0x1b0] sm:$0xff]
    %v89 = vld [vmem:[%s1 + $0x1b8] sm:$0xff]
    %v90 = vld [vmem:[%s1 + $0x1c0] sm:$0xff]
    %v91 = vld [vmem:[%s1 + $0x1c8] sm:$0xff]
    %v92 = vld [vmem:[%s1 + $0x1d0] sm:$0xf]
    %v93 = vld [vmem:[%s1 + $0x1d4] sm:$0xff]
    %v94 = vld [vmem:[%s1 + $0x1dc] sm:$0xff]
    %v95 = vld [vmem:[%s1 + $0x1e4] sm:$0xff]
    %v96 = vld [vmem:[%s1 + $0x1ec] sm:$0xff]
    %v97 = vld [vmem:[%s1 + $0x1f4] sm:$0xff]
    %v98 = vld [vmem:[%s1 + $0x1fc] sm:$0xff]
    %v99 = vld [vmem:[%s1 + $0x204] sm:$0xf]
    %v100 = vld [vmem:[%s1 + $0x208] sm:$0xff]
    %v101 = vld [vmem:[%s1 + $0x210] sm:$0xff]
    %v102 = vld [vmem:[%s1 + $0x218] sm:$0xff]
    %v103 = vld [vmem:[%s1 + $0x220] sm:$0xff]
    %v104 = vld [vmem:[%s1 + $0x228] sm:$0xff]
    %v105 = vld [vmem:[%s1 + $0x230] sm:$0xff]
    %v106 = vld [vmem:[%s1 + $0x238] sm:$0xf]
    %v107 = vld [vmem:[%s1 + $0x23c] sm:$0xff]
    %v108 = vld [vmem:[%s1 + $0x244] sm:$0xff]
    %v109 = vld [vmem:[%s1 + $0x24c] sm:$0xff]
    %v110 = vld [vmem:[%s1 + $0x254] sm:$0xff]
    %v111 = vld [vmem:[%s1 + $0x25c] sm:$0xff]
    %v112 = vld [vmem:[%s1 + $0x264] sm:$0xff]
    %v113 = vld [vmem:[%s1 + $0x26c] sm:$0xf]
    %v114 = vld [vmem:[%s1 + $0x270] sm:$0xff]
    %v115 = vld [vmem:[%s1 + $0x278] sm:$0xff]
    %v116 = vld [vmem:[%s1 + $0x280] sm:$0xff]
    %v117 = vld [vmem:[%s1 + $0x288] sm:$0xff]
    %v118 = vld [vmem:[%s1 + $0x290] sm:$0xff]
    %v119 = vld [vmem:[%s1 + $0x298] sm:$0xff]
    %v120 = vld [vmem:[%s1 + $0x2a0] sm:$0xf]
    %v121 = vld [vmem:[%s1 + $0x2a4] sm:$0xff]
    %v122 = vld [vmem:[%s1 + $0x2ac] sm:$0xff]
    %v123 = vld [vmem:[%s1 + $0x2b4] sm:$0xff]
    %v124 = vld [vmem:[%s1 + $0x2bc] sm:$0xff]
    %v125 = vld [vmem:[%s1 + $0x2c4] sm:$0xff]
    %v126 = vld [vmem:[%s1 + $0x2cc] sm:$0xff]
    %v127 = vld [vmem:[%s1 + $0x2d4] sm:$0xf]
    %v128 = vld [vmem:[%s1 + $0x2d8] sm:$0xff]
    %v129 = vld [vmem:[%s1 + $0x2e0] sm:$0xff]
    %v130 = vld [vmem:[%s1 + $0x2e8] sm:$0xff]
    %v131 = vld [vmem:[%s1 + $0x2f0] sm:$0xff]
    %v132 = vld [vmem:[%s1 + $0x2f8] sm:$0xff]
    %v133 = vld [vmem:[%s1 + $0x300] sm:$0xff]
    %v134 = vld [vmem:[%s1 + $0x308] sm:$0xf]
    %v135 = vld [vmem:[%s1 + $0x30c] sm:$0xff]
    %v136 = vld [vmem:[%s1 + $0x314] sm:$0xff]
    %v137 = vld [vmem:[%s1 + $0x31c] sm:$0xff]
    %v138 = vld [vmem:[%s1 + $0x324] sm:$0xff]
    %v139 = vld [vmem:[%s1 + $0x32c] sm:$0xff]
    %v140 = vld [vmem:[%s1 + $0x334] sm:$0xff]
    %v141 = vld [vmem:[%s1 + $0x33c] sm:$0xf]
    %v142 = vld [vmem:[%s1 + $0x340] sm:$0xff]
    %v143 = vld [vmem:[%s1 + $0x348] sm:$0xff]
    %v144 = vld [vmem:[%s1 + $0x350] sm:$0xff]
    %v145 = vld [vmem:[%s1 + $0x358] sm:$0xff]
    %v146 = vld [vmem:[%s1 + $0x360] sm:$0xff]
    %v147 = vld [vmem:[%s1 + $0x368] sm:$0xff]
    %v148 = vld [vmem:[%s1 + $0x370] sm:$0xf]
    %v149 = vld [vmem:[%s1 + $0x374] sm:$0xff]
    %v150 = vld [vmem:[%s1 + $0x37c] sm:$0xff]
    %v151 = vld [vmem:[%s1 + $0x384] sm:$0xff]
    %v152 = vld [vmem:[%s1 + $0x38c] sm:$0xff]
    %v153 = vld [vmem:[%s1 + $0x394] sm:$0xff]
    %v154 = vld [vmem:[%s1 + $0x39c] sm:$0xff]
    %v155 = vld [vmem:[%s1 + $0x3a4] sm:$0xf]
    %v156 = vld [vmem:[%s1 + $0x3a8] sm:$0xff]
    %v157 = vld [vmem:[%s1 + $0x3b0] sm:$0xff]
    %v158 = vld [vmem:[%s1 + $0x3b8] sm:$0xff]
    %v159 = vld [vmem:[%s1 + $0x3c0] sm:$0xff]
    %v160 = vld [vmem:[%s1 + $0x3c8] sm:$0xff]
    %v161 = vld [vmem:[%s1 + $0x3d0] sm:$0xff]
    %v162 = vld [vmem:[%s1 + $0x3d8] sm:$0xf]
    %v163 = vld [vmem:[%s1 + $0x3dc] sm:$0xff]
    %v164 = vld [vmem:[%s1 + $0x3e4] sm:$0xff]
    %v165 = vld [vmem:[%s1 + $0x3ec] sm:$0xff]
    %v166 = vld [vmem:[%s1 + $0x3f4] sm:$0xff]
    %v167 = vld [vmem:[%s1 + $0x3fc] sm:$0xff]
    %v168 = vld [vmem:[%s1 + $0x404] sm:$0xff]
    %v169 = vld [vmem:[%s1 + $0x40c] sm:$0xf]
    %v170 = vld [vmem:[%s1 + $0x410] sm:$0xff]
    %v171 = vld [vmem:[%s1 + $0x418] sm:$0xff]
    %v172 = vld [vmem:[%s1 + $0x420] sm:$0xff]
    %v173 = vld [vmem:[%s1 + $0x428] sm:$0xff]
    %v174 = vld [vmem:[%s1 + $0x430] sm:$0xff]
    %v175 = vld [vmem:[%s1 + $0x438] sm:$0xff]
    %v176 = vld [vmem:[%s1 + $0x440] sm:$0xf]
    %v177 = vld [vmem:[%s1 + $0x444] sm:$0xff]
    %v178 = vld [vmem:[%s1 + $0x44c] sm:$0xff]
    %v179 = vld [vmem:[%s1 + $0x454] sm:$0xff]
    %v180 = vld [vmem:[%s1 + $0x45c] sm:$0xff]
    %v181 = vld [vmem:[%s1 + $0x464] sm:$0xff]
    %v182 = vld [vmem:[%s1 + $0x46c] sm:$0xff]
    %v183 = vld [vmem:[%s1 + $0x474] sm:$0xf]
    %v184 = vld [vmem:[%s1 + $0x478] sm:$0xff]
    %v185 = vld [vmem:[%s1 + $0x480] sm:$0xff]
    %v186 = vld [vmem:[%s1 + $0x488] sm:$0xff]
    %v187 = vld [vmem:[%s1 + $0x490] sm:$0xff]
    %v188 = vld [vmem:[%s1 + $0x498] sm:$0xff]
    %v189 = vld [vmem:[%s1 + $0x4a0] sm:$0xff]
    %v190 = vld [vmem:[%s1 + $0x4a8] sm:$0xf]
    %v191 = vld [vmem:[%s1 + $0x4ac] sm:$0xff]
    %v192 = vld [vmem:[%s1 + $0x4b4] sm:$0xff]
    %v193 = vld [vmem:[%s1 + $0x4bc] sm:$0xff]
    %v194 = vld [vmem:[%s1 + $0x4c4] sm:$0xff]
    %v195 = vld [vmem:[%s1 + $0x4cc] sm:$0xff]
    %v196 = vld [vmem:[%s1 + $0x4d4] sm:$0xff]
    %v197 = vld [vmem:[%s1 + $0x4dc] sm:$0xf]
    %v198 = vld [vmem:[%s1 + $0x4e0] sm:$0xff]
    %v199 = vld [vmem:[%s1 + $0x4e8] sm:$0xff]
    %v200 = vld [vmem:[%s1 + $0x4f0] sm:$0xff]
    %v201 = vld [vmem:[%s1 + $0x4f8] sm:$0xff]
    %v202 = vld [vmem:[%s1 + $0x500] sm:$0xff]
    %v203 = vld [vmem:[%s1 + $0x508] sm:$0xff]
    %v204 = vld [vmem:[%s1 + $0x510] sm:$0xf]
    %v205 = vld [vmem:[%s1 + $0x514] sm:$0xff]
    %v206 = vld [vmem:[%s1 + $0x51c] sm:$0xff]
    %v207 = vld [vmem:[%s1 + $0x524] sm:$0xff]
    %v208 = vld [vmem:[%s1 + $0x52c] sm:$0xff]
    %v209 = vld [vmem:[%s1 + $0x534] sm:$0xff]
    %v210 = vld [vmem:[%s1 + $0x53c] sm:$0xff]
    %v211 = vld [vmem:[%s1 + $0x544] sm:$0xf]
    %v212 = vld [vmem:[%s1 + $0x548] sm:$0xff]
    %v213 = vld [vmem:[%s1 + $0x550] sm:$0xff]
    %v214 = vld [vmem:[%s1 + $0x558] sm:$0xff]
    %v215 = vld [vmem:[%s1 + $0x560] sm:$0xff]
    %v216 = vld [vmem:[%s1 + $0x568] sm:$0xff]
    %v217 = vld [vmem:[%s1 + $0x570] sm:$0xff]
    %v218 = vld [vmem:[%s1 + $0x578] sm:$0xf]
    %v219 = vld [vmem:[%s1 + $0x57c] sm:$0xff]
    %v220 = vld [vmem:[%s1 + $0x584] sm:$0xff]
    %v221 = vld [vmem:[%s1 + $0x58c] sm:$0xff]
    %v222 = vld [vmem:[%s1 + $0x594] sm:$0xff]
    %v223 = vld [vmem:[%s1 + $0x59c] sm:$0xff]
    %v224 = vld [vmem:[%s1 + $0x5a4] sm:$0xff]
    %v225 = vld [vmem:[%s1 + $0x5ac] sm:$0xf]
    %v226 = vld [vmem:[%s1 + $0x5b0] sm:$0xff]
    %v227 = vld [vmem:[%s1 + $0x5b8] sm:$0xff]
    %v228 = vld [vmem:[%s1 + $0x5c0] sm:$0xff]
    %v229 = vld [vmem:[%s1 + $0x5c8] sm:$0xff]
    %v230 = vld [vmem:[%s1 + $0x5d0] sm:$0xff]
    %v231 = vld [vmem:[%s1 + $0x5d8] sm:$0xff]
    %v232 = vld [vmem:[%s1 + $0x5e0] sm:$0xf]
    %v233 = vld [vmem:[%s1 + $0x5e4] sm:$0xff]
    %v234 = vld [vmem:[%s1 + $0x5ec] sm:$0xff]
    %v235 = vld [vmem:[%s1 + $0x5f4] sm:$0xff]
    %v236 = vld [vmem:[%s1 + $0x5fc] sm:$0xff]
    %v237 = vld [vmem:[%s1 + $0x604] sm:$0xff]
    %v238 = vld [vmem:[%s1 + $0x60c] sm:$0xff]
    %v239 = vld [vmem:[%s1 + $0x614] sm:$0xf]
    %v240 = vld [vmem:[%s1 + $0x618] sm:$0xff]
    %v241 = vld [vmem:[%s1 + $0x620] sm:$0xff]
    %v242 = vld [vmem:[%s1 + $0x628] sm:$0xff]
    %v243 = vld [vmem:[%s1 + $0x630] sm:$0xff]
    %v244 = vld [vmem:[%s1 + $0x638] sm:$0xff]
    %v245 = vld [vmem:[%s1 + $0x640] sm:$0xff]
    %v246 = vld [vmem:[%s1 + $0x648] sm:$0xf]
    %v247 = vld [vmem:[%s1 + $0x64c] sm:$0xff]
    %v248 = vld [vmem:[%s1 + $0x654] sm:$0xff]
    %v249 = vld [vmem:[%s1 + $0x65c] sm:$0xff]
    %v250 = vld [vmem:[%s1 + $0x664] sm:$0xff]
    %v251 = vld [vmem:[%s1 + $0x66c] sm:$0xff]
    %v252 = vld [vmem:[%s1 + $0x674] sm:$0xff]
    %v253 = vld [vmem:[%s1 + $0x67c] sm:$0xf]
    %v254 = vld [vmem:[%s2] sm:$0x3]
    %v256 = vlaneseq
    %v257 = vshrl.u32 %v256, 7
    %v258 = vsub.s32 0, %v257
    %v259 = vrot.slane %v254, %v258
    %v260 = vlaneseq
    %v261 = vshrl.u32 %v260, 7
    %v262 = vsub.s32 1, %v261
    %v263 = vrot.slane %v254, %v262
    %v280 = vunpack.c.l.b16 %v16
    %v281 = vunpack.c.h.b16 %v16
    %v282 = vunpack.c.l.b16 %v17
    %v283 = vunpack.c.h.b16 %v17
    %v284 = vunpack.c.l.b16 %v18
    %v285 = vunpack.c.h.b16 %v18
    %v286 = vunpack.c.l.b16 %v19
    %v287 = vunpack.c.h.b16 %v19
    %v288 = vunpack.c.l.b16 %v20
    %v289 = vunpack.c.h.b16 %v20
    %v290 = vunpack.c.l.b16 %v21
    %v291 = vunpack.c.h.b16 %v21
    %v292 = vunpack.c.l.b16 %v22
    %v293 = vunpack.c.l.b16 %v23
    %v294 = vunpack.c.h.b16 %v23
    %v295 = vunpack.c.l.b16 %v24
    %v296 = vunpack.c.h.b16 %v24
    %v297 = vunpack.c.l.b16 %v25
    %v298 = vunpack.c.h.b16 %v25
    %v299 = vunpack.c.l.b16 %v26
    %v300 = vunpack.c.h.b16 %v26
    %v301 = vunpack.c.l.b16 %v27
    %v302 = vunpack.c.h.b16 %v27
    %v303 = vunpack.c.l.b16 %v28
    %v304 = vunpack.c.h.b16 %v28
    %v305 = vunpack.c.l.b16 %v29
    %v306 = vpack.c.b16 %v293, %v280
    %v307 = vpack.c.b16 %v294, %v281
    %v308 = vpack.c.b16 %v295, %v282
    %v309 = vpack.c.b16 %v296, %v283
    %v310 = vpack.c.b16 %v297, %v284
    %v311 = vpack.c.b16 %v298, %v285
    %v312 = vpack.c.b16 %v299, %v286
    %v313 = vpack.c.b16 %v300, %v287
    %v314 = vpack.c.b16 %v301, %v288
    %v315 = vpack.c.b16 %v302, %v289
    %v316 = vpack.c.b16 %v303, %v290
    %v317 = vpack.c.b16 %v304, %v291
    %v318 = vpack.c.b16 %v305, %v292
    %v555 = vunpack.c.l.b16 %v30
    %v556 = vunpack.c.h.b16 %v30
    %v557 = vunpack.c.l.b16 %v31
    %v558 = vunpack.c.h.b16 %v31
    %v559 = vunpack.c.l.b16 %v32
    %v560 = vunpack.c.h.b16 %v32
    %v561 = vunpack.c.l.b16 %v33
    %v562 = vunpack.c.h.b16 %v33
    %v563 = vunpack.c.l.b16 %v34
    %v564 = vunpack.c.h.b16 %v34
    %v565 = vunpack.c.l.b16 %v35
    %v566 = vunpack.c.h.b16 %v35
    %v567 = vunpack.c.l.b16 %v36
    %v568 = vunpack.c.l.b16 %v37
    %v569 = vunpack.c.h.b16 %v37
    %v570 = vunpack.c.l.b16 %v38
    %v571 = vunpack.c.h.b16 %v38
    %v572 = vunpack.c.l.b16 %v39
    %v573 = vunpack.c.h.b16 %v39
    %v574 = vunpack.c.l.b16 %v40
    %v575 = vunpack.c.h.b16 %v40
    %v576 = vunpack.c.l.b16 %v41
    %v577 = vunpack.c.h.b16 %v41
    %v578 = vunpack.c.l.b16 %v42
    %v579 = vunpack.c.h.b16 %v42
    %v580 = vunpack.c.l.b16 %v43
    %v581 = vunpack.c.l.b16 %v44
    %v582 = vunpack.c.h.b16 %v44
    %v583 = vunpack.c.l.b16 %v45
    %v584 = vunpack.c.h.b16 %v45
    %v585 = vunpack.c.l.b16 %v46
    %v586 = vunpack.c.h.b16 %v46
    %v587 = vunpack.c.l.b16 %v47
    %v588 = vunpack.c.h.b16 %v47
    %v589 = vunpack.c.l.b16 %v48
    %v590 = vunpack.c.h.b16 %v48
    %v591 = vunpack.c.l.b16 %v49
    %v592 = vunpack.c.h.b16 %v49
    %v593 = vunpack.c.l.b16 %v50
    %v594 = vunpack.c.l.b16 %v51
    %v595 = vunpack.c.h.b16 %v51
    %v596 = vunpack.c.l.b16 %v52
    %v597 = vunpack.c.h.b16 %v52
    %v598 = vunpack.c.l.b16 %v53
    %v599 = vunpack.c.h.b16 %v53
    %v600 = vunpack.c.l.b16 %v54
    %v601 = vunpack.c.h.b16 %v54
    %v602 = vunpack.c.l.b16 %v55
    %v603 = vunpack.c.h.b16 %v55
    %v604 = vunpack.c.l.b16 %v56
    %v605 = vunpack.c.h.b16 %v56
    %v606 = vunpack.c.l.b16 %v57
    %v607 = vunpack.c.l.b16 %v58
    %v608 = vunpack.c.h.b16 %v58
    %v609 = vunpack.c.l.b16 %v59
    %v610 = vunpack.c.h.b16 %v59
    %v611 = vunpack.c.l.b16 %v60
    %v612 = vunpack.c.h.b16 %v60
    %v613 = vunpack.c.l.b16 %v61
    %v614 = vunpack.c.h.b16 %v61
    %v615 = vunpack.c.l.b16 %v62
    %v616 = vunpack.c.h.b16 %v62
    %v617 = vunpack.c.l.b16 %v63
    %v618 = vunpack.c.h.b16 %v63
    %v619 = vunpack.c.l.b16 %v64
    %v620 = vunpack.c.l.b16 %v65
    %v621 = vunpack.c.h.b16 %v65
    %v622 = vunpack.c.l.b16 %v66
    %v623 = vunpack.c.h.b16 %v66
    %v624 = vunpack.c.l.b16 %v67
    %v625 = vunpack.c.h.b16 %v67
    %v626 = vunpack.c.l.b16 %v68
    %v627 = vunpack.c.h.b16 %v68
    %v628 = vunpack.c.l.b16 %v69
    %v629 = vunpack.c.h.b16 %v69
    %v630 = vunpack.c.l.b16 %v70
    %v631 = vunpack.c.h.b16 %v70
    %v632 = vunpack.c.l.b16 %v71
    %v633 = vunpack.c.l.b16 %v72
    %v634 = vunpack.c.h.b16 %v72
    %v635 = vunpack.c.l.b16 %v73
    %v636 = vunpack.c.h.b16 %v73
    %v637 = vunpack.c.l.b16 %v74
    %v638 = vunpack.c.h.b16 %v74
    %v639 = vunpack.c.l.b16 %v75
    %v640 = vunpack.c.h.b16 %v75
    %v641 = vunpack.c.l.b16 %v76
    %v642 = vunpack.c.h.b16 %v76
    %v643 = vunpack.c.l.b16 %v77
    %v644 = vunpack.c.h.b16 %v77
    %v645 = vunpack.c.l.b16 %v78
    %v646 = vunpack.c.l.b16 %v79
    %v647 = vunpack.c.h.b16 %v79
    %v648 = vunpack.c.l.b16 %v80
    %v649 = vunpack.c.h.b16 %v80
    %v650 = vunpack.c.l.b16 %v81
    %v651 = vunpack.c.h.b16 %v81
    %v652 = vunpack.c.l.b16 %v82
    %v653 = vunpack.c.h.b16 %v82
    %v654 = vunpack.c.l.b16 %v83
    %v655 = vunpack.c.h.b16 %v83
    %v656 = vunpack.c.l.b16 %v84
    %v657 = vunpack.c.h.b16 %v84
    %v658 = vunpack.c.l.b16 %v85
    %v659 = vunpack.c.l.b16 %v86
    %v660 = vunpack.c.h.b16 %v86
    %v661 = vunpack.c.l.b16 %v87
    %v662 = vunpack.c.h.b16 %v87
    %v663 = vunpack.c.l.b16 %v88
    %v664 = vunpack.c.h.b16 %v88
    %v665 = vunpack.c.l.b16 %v89
    %v666 = vunpack.c.h.b16 %v89
    %v667 = vunpack.c.l.b16 %v90
    %v668 = vunpack.c.h.b16 %v90
    %v669 = vunpack.c.l.b16 %v91
    %v670 = vunpack.c.h.b16 %v91
    %v671 = vunpack.c.l.b16 %v92
    %v672 = vunpack.c.l.b16 %v93
    %v673 = vunpack.c.h.b16 %v93
    %v674 = vunpack.c.l.b16 %v94
    %v675 = vunpack.c.h.b16 %v94
    %v676 = vunpack.c.l.b16 %v95
    %v677 = vunpack.c.h.b16 %v95
    %v678 = vunpack.c.l.b16 %v96
    %v679 = vunpack.c.h.b16 %v96
    %v680 = vunpack.c.l.b16 %v97
    %v681 = vunpack.c.h.b16 %v97
    %v682 = vunpack.c.l.b16 %v98
    %v683 = vunpack.c.h.b16 %v98
    %v684 = vunpack.c.l.b16 %v99
    %v685 = vunpack.c.l.b16 %v100
    %v686 = vunpack.c.h.b16 %v100
    %v687 = vunpack.c.l.b16 %v101
    %v688 = vunpack.c.h.b16 %v101
    %v689 = vunpack.c.l.b16 %v102
    %v690 = vunpack.c.h.b16 %v102
    %v691 = vunpack.c.l.b16 %v103
    %v692 = vunpack.c.h.b16 %v103
    %v693 = vunpack.c.l.b16 %v104
    %v694 = vunpack.c.h.b16 %v104
    %v695 = vunpack.c.l.b16 %v105
    %v696 = vunpack.c.h.b16 %v105
    %v697 = vunpack.c.l.b16 %v106
    %v698 = vunpack.c.l.b16 %v107
    %v699 = vunpack.c.h.b16 %v107
    %v700 = vunpack.c.l.b16 %v108
    %v701 = vunpack.c.h.b16 %v108
    %v702 = vunpack.c.l.b16 %v109
    %v703 = vunpack.c.h.b16 %v109
    %v704 = vunpack.c.l.b16 %v110
    %v705 = vunpack.c.h.b16 %v110
    %v706 = vunpack.c.l.b16 %v111
    %v707 = vunpack.c.h.b16 %v111
    %v708 = vunpack.c.l.b16 %v112
    %v709 = vunpack.c.h.b16 %v112
    %v710 = vunpack.c.l.b16 %v113
    %v711 = vunpack.c.l.b16 %v114
    %v712 = vunpack.c.h.b16 %v114
    %v713 = vunpack.c.l.b16 %v115
    %v714 = vunpack.c.h.b16 %v115
    %v715 = vunpack.c.l.b16 %v116
    %v716 = vunpack.c.h.b16 %v116
    %v717 = vunpack.c.l.b16 %v117
    %v718 = vunpack.c.h.b16 %v117
    %v719 = vunpack.c.l.b16 %v118
    %v720 = vunpack.c.h.b16 %v118
    %v721 = vunpack.c.l.b16 %v119
    %v722 = vunpack.c.h.b16 %v119
    %v723 = vunpack.c.l.b16 %v120
    %v724 = vunpack.c.l.b16 %v121
    %v725 = vunpack.c.h.b16 %v121
    %v726 = vunpack.c.l.b16 %v122
    %v727 = vunpack.c.h.b16 %v122
    %v728 = vunpack.c.l.b16 %v123
    %v729 = vunpack.c.h.b16 %v123
    %v730 = vunpack.c.l.b16 %v124
    %v731 = vunpack.c.h.b16 %v124
    %v732 = vunpack.c.l.b16 %v125
    %v733 = vunpack.c.h.b16 %v125
    %v734 = vunpack.c.l.b16 %v126
    %v735 = vunpack.c.h.b16 %v126
    %v736 = vunpack.c.l.b16 %v127
    %v737 = vunpack.c.l.b16 %v128
    %v738 = vunpack.c.h.b16 %v128
    %v739 = vunpack.c.l.b16 %v129
    %v740 = vunpack.c.h.b16 %v129
    %v741 = vunpack.c.l.b16 %v130
    %v742 = vunpack.c.h.b16 %v130
    %v743 = vunpack.c.l.b16 %v131
    %v744 = vunpack.c.h.b16 %v131
    %v745 = vunpack.c.l.b16 %v132
    %v746 = vunpack.c.h.b16 %v132
    %v747 = vunpack.c.l.b16 %v133
    %v748 = vunpack.c.h.b16 %v133
    %v749 = vunpack.c.l.b16 %v134
    %v750 = vunpack.c.l.b16 %v135
    %v751 = vunpack.c.h.b16 %v135
    %v752 = vunpack.c.l.b16 %v136
    %v753 = vunpack.c.h.b16 %v136
    %v754 = vunpack.c.l.b16 %v137
    %v755 = vunpack.c.h.b16 %v137
    %v756 = vunpack.c.l.b16 %v138
    %v757 = vunpack.c.h.b16 %v138
    %v758 = vunpack.c.l.b16 %v139
    %v759 = vunpack.c.h.b16 %v139
    %v760 = vunpack.c.l.b16 %v140
    %v761 = vunpack.c.h.b16 %v140
    %v762 = vunpack.c.l.b16 %v141
    %v763 = vunpack.c.l.b16 %v142
    %v764 = vunpack.c.h.b16 %v142
    %v765 = vunpack.c.l.b16 %v143
    %v766 = vunpack.c.h.b16 %v143
    %v767 = vunpack.c.l.b16 %v144
    %v768 = vunpack.c.h.b16 %v144
    %v769 = vunpack.c.l.b16 %v145
    %v770 = vunpack.c.h.b16 %v145
    %v771 = vunpack.c.l.b16 %v146
    %v772 = vunpack.c.h.b16 %v146
    %v773 = vunpack.c.l.b16 %v147
    %v774 = vunpack.c.h.b16 %v147
    %v775 = vunpack.c.l.b16 %v148
    %v776 = vunpack.c.l.b16 %v149
    %v777 = vunpack.c.h.b16 %v149
    %v778 = vunpack.c.l.b16 %v150
    %v779 = vunpack.c.h.b16 %v150
    %v780 = vunpack.c.l.b16 %v151
    %v781 = vunpack.c.h.b16 %v151
    %v782 = vunpack.c.l.b16 %v152
    %v783 = vunpack.c.h.b16 %v152
    %v784 = vunpack.c.l.b16 %v153
    %v785 = vunpack.c.h.b16 %v153
    %v786 = vunpack.c.l.b16 %v154
    %v787 = vunpack.c.h.b16 %v154
    %v788 = vunpack.c.l.b16 %v155
    %v789 = vunpack.c.l.b16 %v156
    %v790 = vunpack.c.h.b16 %v156
    %v791 = vunpack.c.l.b16 %v157
    %v792 = vunpack.c.h.b16 %v157
    %v793 = vunpack.c.l.b16 %v158
    %v794 = vunpack.c.h.b16 %v158
    %v795 = vunpack.c.l.b16 %v159
    %v796 = vunpack.c.h.b16 %v159
    %v797 = vunpack.c.l.b16 %v160
    %v798 = vunpack.c.h.b16 %v160
    %v799 = vunpack.c.l.b16 %v161
    %v800 = vunpack.c.h.b16 %v161
    %v801 = vunpack.c.l.b16 %v162
    %v802 = vunpack.c.l.b16 %v163
    %v803 = vunpack.c.h.b16 %v163
    %v804 = vunpack.c.l.b16 %v164
    %v805 = vunpack.c.h.b16 %v164
    %v806 = vunpack.c.l.b16 %v165
    %v807 = vunpack.c.h.b16 %v165
    %v808 = vunpack.c.l.b16 %v166
    %v809 = vunpack.c.h.b16 %v166
    %v810 = vunpack.c.l.b16 %v167
    %v811 = vunpack.c.h.b16 %v167
    %v812 = vunpack.c.l.b16 %v168
    %v813 = vunpack.c.h.b16 %v168
    %v814 = vunpack.c.l.b16 %v169
    %v815 = vunpack.c.l.b16 %v170
    %v816 = vunpack.c.h.b16 %v170
    %v817 = vunpack.c.l.b16 %v171
    %v818 = vunpack.c.h.b16 %v171
    %v819 = vunpack.c.l.b16 %v172
    %v820 = vunpack.c.h.b16 %v172
    %v821 = vunpack.c.l.b16 %v173
    %v822 = vunpack.c.h.b16 %v173
    %v823 = vunpack.c.l.b16 %v174
    %v824 = vunpack.c.h.b16 %v174
    %v825 = vunpack.c.l.b16 %v175
    %v826 = vunpack.c.h.b16 %v175
    %v827 = vunpack.c.l.b16 %v176
    %v828 = vunpack.c.l.b16 %v177
    %v829 = vunpack.c.h.b16 %v177
    %v830 = vunpack.c.l.b16 %v178
    %v831 = vunpack.c.h.b16 %v178
    %v832 = vunpack.c.l.b16 %v179
    %v833 = vunpack.c.h.b16 %v179
    %v834 = vunpack.c.l.b16 %v180
    %v835 = vunpack.c.h.b16 %v180
    %v836 = vunpack.c.l.b16 %v181
    %v837 = vunpack.c.h.b16 %v181
    %v838 = vunpack.c.l.b16 %v182
    %v839 = vunpack.c.h.b16 %v182
    %v840 = vunpack.c.l.b16 %v183
    %v841 = vunpack.c.l.b16 %v184
    %v842 = vunpack.c.h.b16 %v184
    %v843 = vunpack.c.l.b16 %v185
    %v844 = vunpack.c.h.b16 %v185
    %v845 = vunpack.c.l.b16 %v186
    %v846 = vunpack.c.h.b16 %v186
    %v847 = vunpack.c.l.b16 %v187
    %v848 = vunpack.c.h.b16 %v187
    %v849 = vunpack.c.l.b16 %v188
    %v850 = vunpack.c.h.b16 %v188
    %v851 = vunpack.c.l.b16 %v189
    %v852 = vunpack.c.h.b16 %v189
    %v853 = vunpack.c.l.b16 %v190
    %v854 = vunpack.c.l.b16 %v191
    %v855 = vunpack.c.h.b16 %v191
    %v856 = vunpack.c.l.b16 %v192
    %v857 = vunpack.c.h.b16 %v192
    %v858 = vunpack.c.l.b16 %v193
    %v859 = vunpack.c.h.b16 %v193
    %v860 = vunpack.c.l.b16 %v194
    %v861 = vunpack.c.h.b16 %v194
    %v862 = vunpack.c.l.b16 %v195
    %v863 = vunpack.c.h.b16 %v195
    %v864 = vunpack.c.l.b16 %v196
    %v865 = vunpack.c.h.b16 %v196
    %v866 = vunpack.c.l.b16 %v197
    %v867 = vunpack.c.l.b16 %v198
    %v868 = vunpack.c.h.b16 %v198
    %v869 = vunpack.c.l.b16 %v199
    %v870 = vunpack.c.h.b16 %v199
    %v871 = vunpack.c.l.b16 %v200
    %v872 = vunpack.c.h.b16 %v200
    %v873 = vunpack.c.l.b16 %v201
    %v874 = vunpack.c.h.b16 %v201
    %v875 = vunpack.c.l.b16 %v202
    %v876 = vunpack.c.h.b16 %v202
    %v877 = vunpack.c.l.b16 %v203
    %v878 = vunpack.c.h.b16 %v203
    %v879 = vunpack.c.l.b16 %v204
    %v880 = vunpack.c.l.b16 %v205
    %v881 = vunpack.c.h.b16 %v205
    %v882 = vunpack.c.l.b16 %v206
    %v883 = vunpack.c.h.b16 %v206
    %v884 = vunpack.c.l.b16 %v207
    %v885 = vunpack.c.h.b16 %v207
    %v886 = vunpack.c.l.b16 %v208
    %v887 = vunpack.c.h.b16 %v208
    %v888 = vunpack.c.l.b16 %v209
    %v889 = vunpack.c.h.b16 %v209
    %v890 = vunpack.c.l.b16 %v210
    %v891 = vunpack.c.h.b16 %v210
    %v892 = vunpack.c.l.b16 %v211
    %v893 = vunpack.c.l.b16 %v212
    %v894 = vunpack.c.h.b16 %v212
    %v895 = vunpack.c.l.b16 %v213
    %v896 = vunpack.c.h.b16 %v213
    %v897 = vunpack.c.l.b16 %v214
    %v898 = vunpack.c.h.b16 %v214
    %v899 = vunpack.c.l.b16 %v215
    %v900 = vunpack.c.h.b16 %v215
    %v901 = vunpack.c.l.b16 %v216
    %v902 = vunpack.c.h.b16 %v216
    %v903 = vunpack.c.l.b16 %v217
    %v904 = vunpack.c.h.b16 %v217
    %v905 = vunpack.c.l.b16 %v218
    %v906 = vunpack.c.l.b16 %v219
    %v907 = vunpack.c.h.b16 %v219
    %v908 = vunpack.c.l.b16 %v220
    %v909 = vunpack.c.h.b16 %v220
    %v910 = vunpack.c.l.b16 %v221
    %v911 = vunpack.c.h.b16 %v221
    %v912 = vunpack.c.l.b16 %v222
    %v913 = vunpack.c.h.b16 %v222
    %v914 = vunpack.c.l.b16 %v223
    %v915 = vunpack.c.h.b16 %v223
    %v916 = vunpack.c.l.b16 %v224
    %v917 = vunpack.c.h.b16 %v224
    %v918 = vunpack.c.l.b16 %v225
    %v919 = vunpack.c.l.b16 %v226
    %v920 = vunpack.c.h.b16 %v226
    %v921 = vunpack.c.l.b16 %v227
    %v922 = vunpack.c.h.b16 %v227
    %v923 = vunpack.c.l.b16 %v228
    %v924 = vunpack.c.h.b16 %v228
    %v925 = vunpack.c.l.b16 %v229
    %v926 = vunpack.c.h.b16 %v229
    %v927 = vunpack.c.l.b16 %v230
    %v928 = vunpack.c.h.b16 %v230
    %v929 = vunpack.c.l.b16 %v231
    %v930 = vunpack.c.h.b16 %v231
    %v931 = vunpack.c.l.b16 %v232
    %v932 = vunpack.c.l.b16 %v233
    %v933 = vunpack.c.h.b16 %v233
    %v934 = vunpack.c.l.b16 %v234
    %v935 = vunpack.c.h.b16 %v234
    %v936 = vunpack.c.l.b16 %v235
    %v937 = vunpack.c.h.b16 %v235
    %v938 = vunpack.c.l.b16 %v236
    %v939 = vunpack.c.h.b16 %v236
    %v940 = vunpack.c.l.b16 %v237
    %v941 = vunpack.c.h.b16 %v237
    %v942 = vunpack.c.l.b16 %v238
    %v943 = vunpack.c.h.b16 %v238
    %v944 = vunpack.c.l.b16 %v239
    %v945 = vunpack.c.l.b16 %v240
    %v946 = vunpack.c.h.b16 %v240
    %v947 = vunpack.c.l.b16 %v241
    %v948 = vunpack.c.h.b16 %v241
    %v949 = vunpack.c.l.b16 %v242
    %v950 = vunpack.c.h.b16 %v242
    %v951 = vunpack.c.l.b16 %v243
    %v952 = vunpack.c.h.b16 %v243
    %v953 = vunpack.c.l.b16 %v244
    %v954 = vunpack.c.h.b16 %v244
    %v955 = vunpack.c.l.b16 %v245
    %v956 = vunpack.c.h.b16 %v245
    %v957 = vunpack.c.l.b16 %v246
    %v958 = vunpack.c.l.b16 %v247
    %v959 = vunpack.c.h.b16 %v247
    %v960 = vunpack.c.l.b16 %v248
    %v961 = vunpack.c.h.b16 %v248
    %v962 = vunpack.c.l.b16 %v249
    %v963 = vunpack.c.h.b16 %v249
    %v964 = vunpack.c.l.b16 %v250
    %v965 = vunpack.c.h.b16 %v250
    %v966 = vunpack.c.l.b16 %v251
    %v967 = vunpack.c.h.b16 %v251
    %v968 = vunpack.c.l.b16 %v252
    %v969 = vunpack.c.h.b16 %v252
    %v970 = vunpack.c.l.b16 %v253
    %v971 = vpack.c.b16 %v568, %v555
    %v972 = vpack.c.b16 %v569, %v556
    %v973 = vpack.c.b16 %v570, %v557
    %v974 = vpack.c.b16 %v571, %v558
    %v975 = vpack.c.b16 %v572, %v559
    %v976 = vpack.c.b16 %v573, %v560
    %v977 = vpack.c.b16 %v574, %v561
    %v978 = vpack.c.b16 %v575, %v562
    %v979 = vpack.c.b16 %v576, %v563
    %v980 = vpack.c.b16 %v577, %v564
    %v981 = vpack.c.b16 %v578, %v565
    %v982 = vpack.c.b16 %v579, %v566
    %v983 = vpack.c.b16 %v580, %v567
    %v984 = vpack.c.b16 %v594, %v581
    %v985 = vpack.c.b16 %v595, %v582
    %v986 = vpack.c.b16 %v596, %v583
    %v987 = vpack.c.b16 %v597, %v584
    %v988 = vpack.c.b16 %v598, %v585
    %v989 = vpack.c.b16 %v599, %v586
    %v990 = vpack.c.b16 %v600, %v587
    %v991 = vpack.c.b16 %v601, %v588
    %v992 = vpack.c.b16 %v602, %v589
    %v993 = vpack.c.b16 %v603, %v590
    %v994 = vpack.c.b16 %v604, %v591
    %v995 = vpack.c.b16 %v605, %v592
    %v996 = vpack.c.b16 %v606, %v593
    %v997 = vpack.c.b16 %v620, %v607
    %v998 = vpack.c.b16 %v621, %v608
    %v999 = vpack.c.b16 %v622, %v609
    %v1000 = vpack.c.b16 %v623, %v610
    %v1001 = vpack.c.b16 %v624, %v611
    %v1002 = vpack.c.b16 %v625, %v612
    %v1003 = vpack.c.b16 %v626, %v613
    %v1004 = vpack.c.b16 %v627, %v614
    %v1005 = vpack.c.b16 %v628, %v615
    %v1006 = vpack.c.b16 %v629, %v616
    %v1007 = vpack.c.b16 %v630, %v617
    %v1008 = vpack.c.b16 %v631, %v618
    %v1009 = vpack.c.b16 %v632, %v619
    %v1010 = vpack.c.b16 %v646, %v633
    %v1011 = vpack.c.b16 %v647, %v634
    %v1012 = vpack.c.b16 %v648, %v635
    %v1013 = vpack.c.b16 %v649, %v636
    %v1014 = vpack.c.b16 %v650, %v637
    %v1015 = vpack.c.b16 %v651, %v638
    %v1016 = vpack.c.b16 %v652, %v639
    %v1017 = vpack.c.b16 %v653, %v640
    %v1018 = vpack.c.b16 %v654, %v641
    %v1019 = vpack.c.b16 %v655, %v642
    %v1020 = vpack.c.b16 %v656, %v643
    %v1021 = vpack.c.b16 %v657, %v644
    %v1022 = vpack.c.b16 %v658, %v645
    %v1023 = vpack.c.b16 %v672, %v659
    %v1024 = vpack.c.b16 %v673, %v660
    %v1025 = vpack.c.b16 %v674, %v661
    %v1026 = vpack.c.b16 %v675, %v662
    %v1027 = vpack.c.b16 %v676, %v663
    %v1028 = vpack.c.b16 %v677, %v664
    %v1029 = vpack.c.b16 %v678, %v665
    %v1030 = vpack.c.b16 %v679, %v666
    %v1031 = vpack.c.b16 %v680, %v667
    %v1032 = vpack.c.b16 %v681, %v668
    %v1033 = vpack.c.b16 %v682, %v669
    %v1034 = vpack.c.b16 %v683, %v670
    %v1035 = vpack.c.b16 %v684, %v671
    %v1036 = vpack.c.b16 %v698, %v685
    %v1037 = vpack.c.b16 %v699, %v686
    %v1038 = vpack.c.b16 %v700, %v687
    %v1039 = vpack.c.b16 %v701, %v688
    %v1040 = vpack.c.b16 %v702, %v689
    %v1041 = vpack.c.b16 %v703, %v690
    %v1042 = vpack.c.b16 %v704, %v691
    %v1043 = vpack.c.b16 %v705, %v692
    %v1044 = vpack.c.b16 %v706, %v693
    %v1045 = vpack.c.b16 %v707, %v694
    %v1046 = vpack.c.b16 %v708, %v695
    %v1047 = vpack.c.b16 %v709, %v696
    %v1048 = vpack.c.b16 %v710, %v697
    %v1049 = vpack.c.b16 %v724, %v711
    %v1050 = vpack.c.b16 %v725, %v712
    %v1051 = vpack.c.b16 %v726, %v713
    %v1052 = vpack.c.b16 %v727, %v714
    %v1053 = vpack.c.b16 %v728, %v715
    %v1054 = vpack.c.b16 %v729, %v716
    %v1055 = vpack.c.b16 %v730, %v717
    %v1056 = vpack.c.b16 %v731, %v718
    %v1057 = vpack.c.b16 %v732, %v719
    %v1058 = vpack.c.b16 %v733, %v720
    %v1059 = vpack.c.b16 %v734, %v721
    %v1060 = vpack.c.b16 %v735, %v722
    %v1061 = vpack.c.b16 %v736, %v723
    %v1062 = vpack.c.b16 %v750, %v737
    %v1063 = vpack.c.b16 %v751, %v738
    %v1064 = vpack.c.b16 %v752, %v739
    %v1065 = vpack.c.b16 %v753, %v740
    %v1066 = vpack.c.b16 %v754, %v741
    %v1067 = vpack.c.b16 %v755, %v742
    %v1068 = vpack.c.b16 %v756, %v743
    %v1069 = vpack.c.b16 %v757, %v744
    %v1070 = vpack.c.b16 %v758, %v745
    %v1071 = vpack.c.b16 %v759, %v746
    %v1072 = vpack.c.b16 %v760, %v747
    %v1073 = vpack.c.b16 %v761, %v748
    %v1074 = vpack.c.b16 %v762, %v749
    %v1075 = vpack.c.b16 %v776, %v763
    %v1076 = vpack.c.b16 %v777, %v764
    %v1077 = vpack.c.b16 %v778, %v765
    %v1078 = vpack.c.b16 %v779, %v766
    %v1079 = vpack.c.b16 %v780, %v767
    %v1080 = vpack.c.b16 %v781, %v768
    %v1081 = vpack.c.b16 %v782, %v769
    %v1082 = vpack.c.b16 %v783, %v770
    %v1083 = vpack.c.b16 %v784, %v771
    %v1084 = vpack.c.b16 %v785, %v772
    %v1085 = vpack.c.b16 %v786, %v773
    %v1086 = vpack.c.b16 %v787, %v774
    %v1087 = vpack.c.b16 %v788, %v775
    %v1088 = vpack.c.b16 %v802, %v789
    %v1089 = vpack.c.b16 %v803, %v790
    %v1090 = vpack.c.b16 %v804, %v791
    %v1091 = vpack.c.b16 %v805, %v792
    %v1092 = vpack.c.b16 %v806, %v793
    %v1093 = vpack.c.b16 %v807, %v794
    %v1094 = vpack.c.b16 %v808, %v795
    %v1095 = vpack.c.b16 %v809, %v796
    %v1096 = vpack.c.b16 %v810, %v797
    %v1097 = vpack.c.b16 %v811, %v798
    %v1098 = vpack.c.b16 %v812, %v799
    %v1099 = vpack.c.b16 %v813, %v800
    %v1100 = vpack.c.b16 %v814, %v801
    %v1101 = vpack.c.b16 %v828, %v815
    %v1102 = vpack.c.b16 %v829, %v816
    %v1103 = vpack.c.b16 %v830, %v817
    %v1104 = vpack.c.b16 %v831, %v818
    %v1105 = vpack.c.b16 %v832, %v819
    %v1106 = vpack.c.b16 %v833, %v820
    %v1107 = vpack.c.b16 %v834, %v821
    %v1108 = vpack.c.b16 %v835, %v822
    %v1109 = vpack.c.b16 %v836, %v823
    %v1110 = vpack.c.b16 %v837, %v824
    %v1111 = vpack.c.b16 %v838, %v825
    %v1112 = vpack.c.b16 %v839, %v826
    %v1113 = vpack.c.b16 %v840, %v827
    %v1114 = vpack.c.b16 %v854, %v841
    %v1115 = vpack.c.b16 %v855, %v842
    %v1116 = vpack.c.b16 %v856, %v843
    %v1117 = vpack.c.b16 %v857, %v844
    %v1118 = vpack.c.b16 %v858, %v845
    %v1119 = vpack.c.b16 %v859, %v846
    %v1120 = vpack.c.b16 %v860, %v847
    %v1121 = vpack.c.b16 %v861, %v848
    %v1122 = vpack.c.b16 %v862, %v849
    %v1123 = vpack.c.b16 %v863, %v850
    %v1124 = vpack.c.b16 %v864, %v851
    %v1125 = vpack.c.b16 %v865, %v852
    %v1126 = vpack.c.b16 %v866, %v853
    %v1127 = vpack.c.b16 %v880, %v867
    %v1128 = vpack.c.b16 %v881, %v868
    %v1129 = vpack.c.b16 %v882, %v869
    %v1130 = vpack.c.b16 %v883, %v870
    %v1131 = vpack.c.b16 %v884, %v871
    %v1132 = vpack.c.b16 %v885, %v872
    %v1133 = vpack.c.b16 %v886, %v873
    %v1134 = vpack.c.b16 %v887, %v874
    %v1135 = vpack.c.b16 %v888, %v875
    %v1136 = vpack.c.b16 %v889, %v876
    %v1137 = vpack.c.b16 %v890, %v877
    %v1138 = vpack.c.b16 %v891, %v878
    %v1139 = vpack.c.b16 %v892, %v879
    %v1140 = vpack.c.b16 %v906, %v893
    %v1141 = vpack.c.b16 %v907, %v894
    %v1142 = vpack.c.b16 %v908, %v895
    %v1143 = vpack.c.b16 %v909, %v896
    %v1144 = vpack.c.b16 %v910, %v897
    %v1145 = vpack.c.b16 %v911, %v898
    %v1146 = vpack.c.b16 %v912, %v899
    %v1147 = vpack.c.b16 %v913, %v900
    %v1148 = vpack.c.b16 %v914, %v901
    %v1149 = vpack.c.b16 %v915, %v902
    %v1150 = vpack.c.b16 %v916, %v903
    %v1151 = vpack.c.b16 %v917, %v904
    %v1152 = vpack.c.b16 %v918, %v905
    %v1153 = vpack.c.b16 %v932, %v919
    %v1154 = vpack.c.b16 %v933, %v920
    %v1155 = vpack.c.b16 %v934, %v921
    %v1156 = vpack.c.b16 %v935, %v922
    %v1157 = vpack.c.b16 %v936, %v923
    %v1158 = vpack.c.b16 %v937, %v924
    %v1159 = vpack.c.b16 %v938, %v925
    %v1160 = vpack.c.b16 %v939, %v926
    %v1161 = vpack.c.b16 %v940, %v927
    %v1162 = vpack.c.b16 %v941, %v928
    %v1163 = vpack.c.b16 %v942, %v929
    %v1164 = vpack.c.b16 %v943, %v930
    %v1165 = vpack.c.b16 %v944, %v931
    %v1166 = vpack.c.b16 %v958, %v945
    %v1167 = vpack.c.b16 %v959, %v946
    %v1168 = vpack.c.b16 %v960, %v947
    %v1169 = vpack.c.b16 %v961, %v948
    %v1170 = vpack.c.b16 %v962, %v949
    %v1171 = vpack.c.b16 %v963, %v950
    %v1172 = vpack.c.b16 %v964, %v951
    %v1173 = vpack.c.b16 %v965, %v952
    %v1174 = vpack.c.b16 %v966, %v953
    %v1175 = vpack.c.b16 %v967, %v954
    %v1176 = vpack.c.b16 %v968, %v955
    %v1177 = vpack.c.b16 %v969, %v956
    %v1178 = vpack.c.b16 %v970, %v957
    %vm1371 = vcmask 261120
    %v1373 = vsel %vm1371, %v318, 0
    %v1376 = vsel %vm1371, %v983, 0
    %v1379 = vsel %vm1371, %v996, 0
    %v1382 = vsel %vm1371, %v1009, 0
    %v1385 = vsel %vm1371, %v1022, 0
    %v1388 = vsel %vm1371, %v1035, 0
    %v1391 = vsel %vm1371, %v1048, 0
    %v1394 = vsel %vm1371, %v1061, 0
    %v1397 = vsel %vm1371, %v1074, 0
    %v1400 = vsel %vm1371, %v1087, 0
    %v1403 = vsel %vm1371, %v1100, 0
    %v1406 = vsel %vm1371, %v1113, 0
    %v1409 = vsel %vm1371, %v1126, 0
    %v1412 = vsel %vm1371, %v1139, 0
    %v1415 = vsel %vm1371, %v1152, 0
    %v1418 = vsel %vm1371, %v1165, 0
    %v1421 = vsel %vm1371, %v1178, 0
    %1423 = vmatprep.subr.bf16.mxu0 %v972
    %1424 = vmatpush1.bf16.xpose.msra.mxu0 %v971
    %1425 = vmatprep.subr.bf16.mxu0 %v985
    %1426 = vmatpush1.bf16.xpose.msra.mxu0 %v984
    %1427 = vmatprep.subr.bf16.mxu0 %v998
    %1428 = vmatpush1.bf16.xpose.msra.mxu0 %v997
    %1429 = vmatprep.subr.bf16.mxu0 %v1011
    %1430 = vmatpush1.bf16.xpose.msra.mxu0 %v1010
    %1431 = vmatprep.subr.bf16.mxu0 %v1024
    %1432 = vmatpush1.bf16.xpose.msra.mxu0 %v1023
    %1433 = vmatprep.subr.bf16.mxu0 %v1037
    %1434 = vmatpush1.bf16.xpose.msra.mxu0 %v1036
    %1435 = vmatprep.subr.bf16.mxu0 %v1050
    %1436 = vmatpush1.bf16.xpose.msra.mxu0 %v1049
    %1437 = vmatprep.subr.bf16.mxu0 %v1063
    %1438 = vmatpush1.bf16.xpose.msra.mxu0 %v1062
    %1439 = vmatprep.subr.bf16.mxu0 %v1076
    %1440 = vmatpush1.bf16.xpose.msra.mxu0 %v1075
    %1441 = vmatprep.subr.bf16.mxu0 %v1089
    %1442 = vmatpush1.bf16.xpose.msra.mxu0 %v1088
    %1443 = vmatprep.subr.bf16.mxu0 %v1102
    %1444 = vmatpush1.bf16.xpose.msra.mxu0 %v1101
    %1445 = vmatprep.subr.bf16.mxu0 %v1115
    %1446 = vmatpush1.bf16.xpose.msra.mxu0 %v1114
    %1447 = vmatprep.subr.bf16.mxu0 %v1128
    %1448 = vmatpush1.bf16.xpose.msra.mxu0 %v1127
    %1449 = vmatprep.subr.bf16.mxu0 %v1141
    %1450 = vmatpush1.bf16.xpose.msra.mxu0 %v1140
    %1451 = vmatprep.subr.bf16.mxu0 %v1154
    %1452 = vmatpush1.bf16.xpose.msra.mxu0 %v1153
    %1453 = vmatprep.subr.bf16.mxu0 %v1167
    %1454 = vmatpush1.bf16.xpose.msra.mxu0 %v1166
    %1455 = vmatprep.mubr.bf16.mxu0 %v307
    %1456 = vmatmul.mubr.bf16.gmra.mrb[0].mxu0 %v306
    %v1457 = vpop.f32.mrb[0].mxu0
    %v1458 = vadd.f32 %v259, %v1457
    %v1459 = vpop.f32.mrb[0].mxu0
    %v1460 = vadd.f32 %v263, %v1459
    %v1461 = vpop.f32.mrb[0].mxu0
    %v1462 = vadd.f32 %v259, %v1461
    %v1463 = vpop.f32.mrb[0].mxu0
    %v1464 = vadd.f32 %v263, %v1463
    %1465 = vdwg.mxu0
    %1466 = vmatprep.subr.bf16.mxu0 %v974
    %1467 = vmatpush1.bf16.xpose.msra.mxu0 %v973
    %1468 = vmatprep.subr.bf16.mxu0 %v987
    %1469 = vmatpush1.bf16.xpose.msra.mxu0 %v986
    %1470 = vmatprep.subr.bf16.mxu0 %v1000
    %1471 = vmatpush1.bf16.xpose.msra.mxu0 %v999
    %1472 = vmatprep.subr.bf16.mxu0 %v1013
    %1473 = vmatpush1.bf16.xpose.msra.mxu0 %v1012
    %1474 = vmatprep.subr.bf16.mxu0 %v1026
    %1475 = vmatpush1.bf16.xpose.msra.mxu0 %v1025
    %1476 = vmatprep.subr.bf16.mxu0 %v1039
    %1477 = vmatpush1.bf16.xpose.msra.mxu0 %v1038
    %1478 = vmatprep.subr.bf16.mxu0 %v1052
    %1479 = vmatpush1.bf16.xpose.msra.mxu0 %v1051
    %1480 = vmatprep.subr.bf16.mxu0 %v1065
    %1481 = vmatpush1.bf16.xpose.msra.mxu0 %v1064
    %1482 = vmatprep.subr.bf16.mxu0 %v1078
    %1483 = vmatpush1.bf16.xpose.msra.mxu0 %v1077
    %1484 = vmatprep.subr.bf16.mxu0 %v1091
    %1485 = vmatpush1.bf16.xpose.msra.mxu0 %v1090
    %1486 = vmatprep.subr.bf16.mxu0 %v1104
    %1487 = vmatpush1.bf16.xpose.msra.mxu0 %v1103
    %1488 = vmatprep.subr.bf16.mxu0 %v1117
    %1489 = vmatpush1.bf16.xpose.msra.mxu0 %v1116
    %1490 = vmatprep.subr.bf16.mxu0 %v1130
    %1491 = vmatpush1.bf16.xpose.msra.mxu0 %v1129
    %1492 = vmatprep.subr.bf16.mxu0 %v1143
    %1493 = vmatpush1.bf16.xpose.msra.mxu0 %v1142
    %1494 = vmatprep.subr.bf16.mxu0 %v1156
    %1495 = vmatpush1.bf16.xpose.msra.mxu0 %v1155
    %1496 = vmatprep.subr.bf16.mxu0 %v1169
    %1497 = vmatpush1.bf16.xpose.msra.mxu0 %v1168
    %1498 = vmatprep.mubr.bf16.mxu0 %v309
    %1499 = vmatmul.mubr.bf16.gmra.mrb[0].mxu0 %v308
    %v1500 = vpop.f32.mrb[0].mxu0
    %v1501 = vadd.f32 %v1458, %v1500
    %v1502 = vpop.f32.mrb[0].mxu0
    %v1503 = vadd.f32 %v1460, %v1502
    %v1504 = vpop.f32.mrb[0].mxu0
    %v1505 = vadd.f32 %v1462, %v1504
    %v1506 = vpop.f32.mrb[0].mxu0
    %v1507 = vadd.f32 %v1464, %v1506
    %1508 = vdwg.mxu0
    %1509 = vmatprep.subr.bf16.mxu0 %v976
    %1510 = vmatpush1.bf16.xpose.msra.mxu0 %v975
    %1511 = vmatprep.subr.bf16.mxu0 %v989
    %1512 = vmatpush1.bf16.xpose.msra.mxu0 %v988
    %1513 = vmatprep.subr.bf16.mxu0 %v1002
    %1514 = vmatpush1.bf16.xpose.msra.mxu0 %v1001
    %1515 = vmatprep.subr.bf16.mxu0 %v1015
    %1516 = vmatpush1.bf16.xpose.msra.mxu0 %v1014
    %1517 = vmatprep.subr.bf16.mxu0 %v1028
    %1518 = vmatpush1.bf16.xpose.msra.mxu0 %v1027
    %1519 = vmatprep.subr.bf16.mxu0 %v1041
    %1520 = vmatpush1.bf16.xpose.msra.mxu0 %v1040
    %1521 = vmatprep.subr.bf16.mxu0 %v1054
    %1522 = vmatpush1.bf16.xpose.msra.mxu0 %v1053
    %1523 = vmatprep.subr.bf16.mxu0 %v1067
    %1524 = vmatpush1.bf16.xpose.msra.mxu0 %v1066
    %1525 = vmatprep.subr.bf16.mxu0 %v1080
    %1526 = vmatpush1.bf16.xpose.msra.mxu0 %v1079
    %1527 = vmatprep.subr.bf16.mxu0 %v1093
    %1528 = vmatpush1.bf16.xpose.msra.mxu0 %v1092
    %1529 = vmatprep.subr.bf16.mxu0 %v1106
    %1530 = vmatpush1.bf16.xpose.msra.mxu0 %v1105
    %1531 = vmatprep.subr.bf16.mxu0 %v1119
    %1532 = vmatpush1.bf16.xpose.msra.mxu0 %v1118
    %1533 = vmatprep.subr.bf16.mxu0 %v1132
    %1534 = vmatpush1.bf16.xpose.msra.mxu0 %v1131
    %1535 = vmatprep.subr.bf16.mxu0 %v1145
    %1536 = vmatpush1.bf16.xpose.msra.mxu0 %v1144
    %1537 = vmatprep.subr.bf16.mxu0 %v1158
    %1538 = vmatpush1.bf16.xpose.msra.mxu0 %v1157
    %1539 = vmatprep.subr.bf16.mxu0 %v1171
    %1540 = vmatpush1.bf16.xpose.msra.mxu0 %v1170
    %1541 = vmatprep.mubr.bf16.mxu0 %v311
    %1542 = vmatmul.mubr.bf16.gmra.mrb[0].mxu0 %v310
    %v1543 = vpop.f32.mrb[0].mxu0
    %v1544 = vadd.f32 %v1501, %v1543
    %v1545 = vpop.f32.mrb[0].mxu0
    %v1546 = vadd.f32 %v1503, %v1545
    %v1547 = vpop.f32.mrb[0].mxu0
    %v1548 = vadd.f32 %v1505, %v1547
    %v1549 = vpop.f32.mrb[0].mxu0
    %v1550 = vadd.f32 %v1507, %v1549
    %1551 = vdwg.mxu0
    %1552 = vmatprep.subr.bf16.mxu0 %v978
    %1553 = vmatpush1.bf16.xpose.msra.mxu0 %v977
    %1554 = vmatprep.subr.bf16.mxu0 %v991
    %1555 = vmatpush1.bf16.xpose.msra.mxu0 %v990
    %1556 = vmatprep.subr.bf16.mxu0 %v1004
    %1557 = vmatpush1.bf16.xpose.msra.mxu0 %v1003
    %1558 = vmatprep.subr.bf16.mxu0 %v1017
    %1559 = vmatpush1.bf16.xpose.msra.mxu0 %v1016
    %1560 = vmatprep.subr.bf16.mxu0 %v1030
    %1561 = vmatpush1.bf16.xpose.msra.mxu0 %v1029
    %1562 = vmatprep.subr.bf16.mxu0 %v1043
    %1563 = vmatpush1.bf16.xpose.msra.mxu0 %v1042
    %1564 = vmatprep.subr.bf16.mxu0 %v1056
    %1565 = vmatpush1.bf16.xpose.msra.mxu0 %v1055
    %1566 = vmatprep.subr.bf16.mxu0 %v1069
    %1567 = vmatpush1.bf16.xpose.msra.mxu0 %v1068
    %1568 = vmatprep.subr.bf16.mxu0 %v1082
    %1569 = vmatpush1.bf16.xpose.msra.mxu0 %v1081
    %1570 = vmatprep.subr.bf16.mxu0 %v1095
    %1571 = vmatpush1.bf16.xpose.msra.mxu0 %v1094
    %1572 = vmatprep.subr.bf16.mxu0 %v1108
    %1573 = vmatpush1.bf16.xpose.msra.mxu0 %v1107
    %1574 = vmatprep.subr.bf16.mxu0 %v1121
    %1575 = vmatpush1.bf16.xpose.msra.mxu0 %v1120
    %1576 = vmatprep.subr.bf16.mxu0 %v1134
    %1577 = vmatpush1.bf16.xpose.msra.mxu0 %v1133
    %1578 = vmatprep.subr.bf16.mxu0 %v1147
    %1579 = vmatpush1.bf16.xpose.msra.mxu0 %v1146
    %1580 = vmatprep.subr.bf16.mxu0 %v1160
    %1581 = vmatpush1.bf16.xpose.msra.mxu0 %v1159
    %1582 = vmatprep.subr.bf16.mxu0 %v1173
    %1583 = vmatpush1.bf16.xpose.msra.mxu0 %v1172
    %1584 = vmatprep.mubr.bf16.mxu0 %v313
    %1585 = vmatmul.mubr.bf16.gmra.mrb[0].mxu0 %v312
    %v1586 = vpop.f32.mrb[0].mxu0
    %v1587 = vadd.f32 %v1544, %v1586
    %v1588 = vpop.f32.mrb[0].mxu0
    %v1589 = vadd.f32 %v1546, %v1588
    %v1590 = vpop.f32.mrb[0].mxu0
    %v1591 = vadd.f32 %v1548, %v1590
    %v1592 = vpop.f32.mrb[0].mxu0
    %v1593 = vadd.f32 %v1550, %v1592
    %1594 = vdwg.mxu0
    %1595 = vmatprep.subr.bf16.mxu0 %v980
    %1596 = vmatpush1.bf16.xpose.msra.mxu0 %v979
    %1597 = vmatprep.subr.bf16.mxu0 %v993
    %1598 = vmatpush1.bf16.xpose.msra.mxu0 %v992
    %1599 = vmatprep.subr.bf16.mxu0 %v1006
    %1600 = vmatpush1.bf16.xpose.msra.mxu0 %v1005
    %1601 = vmatprep.subr.bf16.mxu0 %v1019
    %1602 = vmatpush1.bf16.xpose.msra.mxu0 %v1018
    %1603 = vmatprep.subr.bf16.mxu0 %v1032
    %1604 = vmatpush1.bf16.xpose.msra.mxu0 %v1031
    %1605 = vmatprep.subr.bf16.mxu0 %v1045
    %1606 = vmatpush1.bf16.xpose.msra.mxu0 %v1044
    %1607 = vmatprep.subr.bf16.mxu0 %v1058
    %1608 = vmatpush1.bf16.xpose.msra.mxu0 %v1057
    %1609 = vmatprep.subr.bf16.mxu0 %v1071
    %1610 = vmatpush1.bf16.xpose.msra.mxu0 %v1070
    %1611 = vmatprep.subr.bf16.mxu0 %v1084
    %1612 = vmatpush1.bf16.xpose.msra.mxu0 %v1083
    %1613 = vmatprep.subr.bf16.mxu0 %v1097
    %1614 = vmatpush1.bf16.xpose.msra.mxu0 %v1096
    %1615 = vmatprep.subr.bf16.mxu0 %v1110
    %1616 = vmatpush1.bf16.xpose.msra.mxu0 %v1109
    %1617 = vmatprep.subr.bf16.mxu0 %v1123
    %1618 = vmatpush1.bf16.xpose.msra.mxu0 %v1122
    %1619 = vmatprep.subr.bf16.mxu0 %v1136
    %1620 = vmatpush1.bf16.xpose.msra.mxu0 %v1135
    %1621 = vmatprep.subr.bf16.mxu0 %v1149
    %1622 = vmatpush1.bf16.xpose.msra.mxu0 %v1148
    %1623 = vmatprep.subr.bf16.mxu0 %v1162
    %1624 = vmatpush1.bf16.xpose.msra.mxu0 %v1161
    %1625 = vmatprep.subr.bf16.mxu0 %v1175
    %1626 = vmatpush1.bf16.xpose.msra.mxu0 %v1174
    %1627 = vmatprep.mubr.bf16.mxu0 %v315
    %1628 = vmatmul.mubr.bf16.gmra.mrb[0].mxu0 %v314
    %v1629 = vpop.f32.mrb[0].mxu0
    %v1630 = vadd.f32 %v1587, %v1629
    %v1631 = vpop.f32.mrb[0].mxu0
    %v1632 = vadd.f32 %v1589, %v1631
    %v1633 = vpop.f32.mrb[0].mxu0
    %v1634 = vadd.f32 %v1591, %v1633
    %v1635 = vpop.f32.mrb[0].mxu0
    %v1636 = vadd.f32 %v1593, %v1635
    %1637 = vdwg.mxu0
    %1638 = vmatprep.subr.bf16.mxu0 %v982
    %1639 = vmatpush1.bf16.xpose.msra.mxu0 %v981
    %1640 = vmatprep.subr.bf16.mxu0 %v995
    %1641 = vmatpush1.bf16.xpose.msra.mxu0 %v994
    %1642 = vmatprep.subr.bf16.mxu0 %v1008
    %1643 = vmatpush1.bf16.xpose.msra.mxu0 %v1007
    %1644 = vmatprep.subr.bf16.mxu0 %v1021
    %1645 = vmatpush1.bf16.xpose.msra.mxu0 %v1020
    %1646 = vmatprep.subr.bf16.mxu0 %v1034
    %1647 = vmatpush1.bf16.xpose.msra.mxu0 %v1033
    %1648 = vmatprep.subr.bf16.mxu0 %v1047
    %1649 = vmatpush1.bf16.xpose.msra.mxu0 %v1046
    %1650 = vmatprep.subr.bf16.mxu0 %v1060
    %1651 = vmatpush1.bf16.xpose.msra.mxu0 %v1059
    %1652 = vmatprep.subr.bf16.mxu0 %v1073
    %1653 = vmatpush1.bf16.xpose.msra.mxu0 %v1072
    %1654 = vmatprep.subr.bf16.mxu0 %v1086
    %1655 = vmatpush1.bf16.xpose.msra.mxu0 %v1085
    %1656 = vmatprep.subr.bf16.mxu0 %v1099
    %1657 = vmatpush1.bf16.xpose.msra.mxu0 %v1098
    %1658 = vmatprep.subr.bf16.mxu0 %v1112
    %1659 = vmatpush1.bf16.xpose.msra.mxu0 %v1111
    %1660 = vmatprep.subr.bf16.mxu0 %v1125
    %1661 = vmatpush1.bf16.xpose.msra.mxu0 %v1124
    %1662 = vmatprep.subr.bf16.mxu0 %v1138
    %1663 = vmatpush1.bf16.xpose.msra.mxu0 %v1137
    %1664 = vmatprep.subr.bf16.mxu0 %v1151
    %1665 = vmatpush1.bf16.xpose.msra.mxu0 %v1150
    %1666 = vmatprep.subr.bf16.mxu0 %v1164
    %1667 = vmatpush1.bf16.xpose.msra.mxu0 %v1163
    %1668 = vmatprep.subr.bf16.mxu0 %v1177
    %1669 = vmatpush1.bf16.xpose.msra.mxu0 %v1176
    %1670 = vmatprep.mubr.bf16.mxu0 %v317
    %1671 = vmatmul.mubr.bf16.gmra.mrb[0].mxu0 %v316
    %v1672 = vpop.f32.mrb[0].mxu0
    %v1673 = vadd.f32 %v1630, %v1672
    %v1674 = vpop.f32.mrb[0].mxu0
    %v1675 = vadd.f32 %v1632, %v1674
    %v1676 = vpop.f32.mrb[0].mxu0
    %v1677 = vadd.f32 %v1634, %v1676
    %v1678 = vpop.f32.mrb[0].mxu0
    %v1679 = vadd.f32 %v1636, %v1678
    %1680 = vdwg.mxu0
    %1681 = vmatprep.subr.bf16.mxu0 0
    %1682 = vmatpush1.bf16.xpose.msra.mxu0 %v1376
    %1683 = vmatprep.subr.bf16.mxu0 0
    %1684 = vmatpush1.bf16.xpose.msra.mxu0 %v1379
    %1685 = vmatprep.subr.bf16.mxu0 0
    %1686 = vmatpush1.bf16.xpose.msra.mxu0 %v1382
    %1687 = vmatprep.subr.bf16.mxu0 0
    %1688 = vmatpush1.bf16.xpose.msra.mxu0 %v1385
    %1689 = vmatprep.subr.bf16.mxu0 0
    %1690 = vmatpush1.bf16.xpose.msra.mxu0 %v1388
    %1691 = vmatprep.subr.bf16.mxu0 0
    %1692 = vmatpush1.bf16.xpose.msra.mxu0 %v1391
    %1693 = vmatprep.subr.bf16.mxu0 0
    %1694 = vmatpush1.bf16.xpose.msra.mxu0 %v1394
    %1695 = vmatprep.subr.bf16.mxu0 0
    %1696 = vmatpush1.bf16.xpose.msra.mxu0 %v1397
    %1697 = vmatprep.subr.bf16.mxu0 0
    %1698 = vmatpush1.bf16.xpose.msra.mxu0 %v1400
    %1699 = vmatprep.subr.bf16.mxu0 0
    %1700 = vmatpush1.bf16.xpose.msra.mxu0 %v1403
    %1701 = vmatprep.subr.bf16.mxu0 0
    %1702 = vmatpush1.bf16.xpose.msra.mxu0 %v1406
    %1703 = vmatprep.subr.bf16.mxu0 0
    %1704 = vmatpush1.bf16.xpose.msra.mxu0 %v1409
    %1705 = vmatprep.subr.bf16.mxu0 0
    %1706 = vmatpush1.bf16.xpose.msra.mxu0 %v1412
    %1707 = vmatprep.subr.bf16.mxu0 0
    %1708 = vmatpush1.bf16.xpose.msra.mxu0 %v1415
    %1709 = vmatprep.subr.bf16.mxu0 0
    %1710 = vmatpush1.bf16.xpose.msra.mxu0 %v1418
    %1711 = vmatprep.subr.bf16.mxu0 0
    %1712 = vmatpush1.bf16.xpose.msra.mxu0 %v1421
    %1713 = vmatprep.mubr.bf16.mxu0 0
    %1714 = vmatmul.mubr.bf16.gmra.mrb[0].mxu0 %v1373
    %v1715 = vpop.f32.mrb[0].mxu0
    %v1716 = vadd.f32 %v1673, %v1715
    %v1717 = vpop.f32.mrb[0].mxu0
    %v1718 = vadd.f32 %v1675, %v1717
    %v1719 = vpop.f32.mrb[0].mxu0
    %v1720 = vadd.f32 %v1677, %v1719
    %v1721 = vpop.f32.mrb[0].mxu0
    %v1722 = vadd.f32 %v1679, %v1721
    %1723 = vdwg.mxu0
    %1724 = vst [vmem:[#allocation2] sm:$0xff] %v1716
    %1725 = vst [vmem:[#allocation2 + $0x8] sm:$0xff] %v1718
    %1726 = vst [vmem:[#allocation2 + $0x10] sm:$0xff] %v1720
    %1727 = vst [vmem:[#allocation2 + $0x18] sm:$0xff] %v1722
    // Predicated region
    $region14: #{tpu_custom_call.1} parent=1 // pred_check
      _
    $region15: #{tpu_custom_call.1} parent=1 // pred_check_branch
      %1729 = sbr.rel (0) target = $region17
    $region16: #{tpu_custom_call.1} parent=1 // pred_region
      %s1731 = ssub.s32 512, 512
      %1732 = vsyncadd [#allocation3], %s1731
      %s1733 = sshll.u32 [#allocation2], 4
      %s1734 = int_to_ptr.vmem [resolvable:$true] %s1733
      %1739 = dma.vmem_to_hbm [thread:$0]  %s1734, 512, %s3, [#allocation3], 256, 256, 16
    $region17: #{tpu_custom_call.1} parent=1 // pred_fallthru
      _
    // Predicated region
    $region18: #{tpu_custom_call.1} parent=1 // pred_check
      _
    $region19: #{tpu_custom_call.1} parent=1 // pred_check_branch
      %1741 = sbr.rel (0) target = $region21
    $region20: #{tpu_custom_call.1} parent=1 // pred_region
      %1742 = dma.done [#allocation3], 512
    $region21: #{tpu_custom_call.1} parent=1 // pred_fallthru
      _
    %1743 = vsyncpa [#allocation3], 1

</llo_original>
